<compile_context>
chip_gen: v6e
topology: v6e:2x2x1
jax: 0.10.0
libtpu: 0.0.40
codegen_flags: <defaults>
</compile_context>

<pallas_src>
import jax
import jax.numpy as jnp
from jax.experimental import pallas as pl
from jax.experimental.pallas import tpu as pltpu

FEATURE_DIM = 128  # nn.Linear default feature_dim of the module; keeps lanes dense


def attention_unit_kernel(vx_ref, ax_ref, w1a_ref, w1b_ref, b1_ref,
                          w2_ref, b2_ref, o_ref):
    # fc1 on the split concat: cat([vx, ax], -1) @ W1 == vx @ W1[:F] + ax @ W1[F:]
    vx = vx_ref[...].astype(jnp.bfloat16)
    ax = ax_ref[...].astype(jnp.bfloat16)
    h = jnp.dot(vx, w1a_ref[...], preferred_element_type=jnp.float32)
    h = h + jnp.dot(ax, w1b_ref[...], preferred_element_type=jnp.float32)
    h = jnp.maximum(h + b1_ref[...], 0.0)        # relu  (dropout == identity)
    # TODO(synk): self.dropout is referenced in forward() but never created in
    #             __init__ of the reference module; eval-mode / identity assumed.
    out = jnp.dot(h.astype(jnp.bfloat16), w2_ref[...],
                  preferred_element_type=jnp.float32)
    out = jnp.maximum(out + b2_ref[...], 0.0)
    o_ref[...] = out.astype(o_ref.dtype)


def attention_unit(vx, ax, w1, b1, w2, b2, *, max_block_m=1024):
    """vx, ax: (..., F).  w1: (2F, F), b1: (F,), w2: (F, F), b2: (F,) — all (in, out)."""
    f = vx.shape[-1]
    assert ax.shape == vx.shape
    assert w1.shape == (2 * f, f) and w2.shape == (f, f)

    lead_shape = vx.shape[:-1]
    m = 1
    for d in lead_shape:
        m *= d
    vx2 = vx.reshape(m, f)
    ax2 = ax.reshape(m, f)

    # Row tile: as large as comfortably fits VMEM, without materializing any
    # padded copy of the inputs.  A full-extent block (m <= max_block_m) is always
    # legal; otherwise block_m is a multiple of 8 and Pallas masks the ragged tail.
    if m <= max_block_m:
        block_m = m
        grid = (1,)
    else:
        block_m = max_block_m
        grid = (pl.cdiv(m, block_m),)

    # Weights resident in VMEM for the whole grid; cast once to bf16 for the MXU.
    w1a = w1[:f].astype(jnp.bfloat16)          # multiplies vx
    w1b = w1[f:].astype(jnp.bfloat16)          # multiplies ax
    w2b = w2.astype(jnp.bfloat16)
    b1_2d = b1.reshape(1, f).astype(jnp.float32)
    b2_2d = b2.reshape(1, f).astype(jnp.float32)

    out = pl.pallas_call(
        attention_unit_kernel,
        out_shape=jax.ShapeDtypeStruct((m, f), vx.dtype),
        grid_spec=pltpu.PrefetchScalarGridSpec(
            num_scalar_prefetch=0,
            grid=grid,
            in_specs=[
                pl.BlockSpec((block_m, f), lambda i: (i, 0)),   # vx tile
                pl.BlockSpec((block_m, f), lambda i: (i, 0)),   # ax tile
                pl.BlockSpec((f, f), lambda i: (0, 0)),         # W1 top half (resident)
                pl.BlockSpec((f, f), lambda i: (0, 0)),         # W1 bottom half (resident)
                pl.BlockSpec((1, f), lambda i: (0, 0)),         # b1
                pl.BlockSpec((f, f), lambda i: (0, 0)),         # W2 (resident)
                pl.BlockSpec((1, f), lambda i: (0, 0)),         # b2
            ],
            out_specs=pl.BlockSpec((block_m, f), lambda i: (i, 0)),
        ),
        compiler_params=pltpu.CompilerParams(
            dimension_semantics=("parallel",),       # megacore / v7x 2-TC sharding
            vmem_limit_bytes=32 * 1024 * 1024,       # explicit; safe on v5e/v6e/v7x
        ),
    )(vx2, ax2, w1a, w1b, b1_2d, w2b, b2_2d)

    return out.reshape(*lead_shape, f)


def init_params(key, feature_dim):
    """Deterministic init mimicking nn.Linear default (uniform +/- 1/sqrt(fan_in))."""
    k1, k2, k3, k4 = jax.random.split(key, 4)
    fan1 = 2 * feature_dim
    fan2 = feature_dim
    bound1 = 1.0 / jnp.sqrt(fan1)
    bound2 = 1.0 / jnp.sqrt(fan2)
    # Stored pre-transposed as (in_features, out_features).
    w1 = jax.random.uniform(k1, (fan1, feature_dim), jnp.float32, -bound1, bound1)
    b1 = jax.random.uniform(k2, (feature_dim,), jnp.float32, -bound1, bound1)
    w2 = jax.random.uniform(k3, (fan2, feature_dim), jnp.float32, -bound2, bound2)
    b2 = jax.random.uniform(k4, (feature_dim,), jnp.float32, -bound2, bound2)
    return w1, b1, w2, b2


def attention_unit_ref(vx, ax, w1, b1, w2, b2):
    """Pure-JAX f32 reference for correctness check."""
    x = jnp.concatenate([vx, ax], axis=-1)
    h = jnp.maximum(x @ w1 + b1, 0.0)
    return jnp.maximum(h @ w2 + b2, 0.0)


if __name__ == "__main__":
    key = jax.random.PRNGKey(0)
    kv, ka, kp = jax.random.split(key, 3)

    # Small shapes consistent with the module (feature_dim = 128 default).
    batch, seq, feat = 2, 8, FEATURE_DIM
    vx = jax.random.normal(kv, (batch, seq, feat), jnp.float32)
    ax = jax.random.normal(ka, (batch, seq, feat), jnp.float32)
    w1, b1, w2, b2 = init_params(kp, feat)

    out = jax.block_until_ready(attention_unit(vx, ax, w1, b1, w2, b2))
    ref = attention_unit_ref(vx, ax, w1, b1, w2, b2)
    assert out.shape == (batch, seq, feat), out.shape
    err = float(jnp.max(jnp.abs(out - ref)))
    assert err < 5e-2, err  # bf16 operands, f32 accumulation vs full-f32 reference

    # Also exercise the multi-block / ragged-tail path (grid = cdiv(300, 128) = 3).
    kv2, ka2 = jax.random.split(jax.random.PRNGKey(1))
    vx_b = jax.random.normal(kv2, (3, 100, feat), jnp.float32)
    ax_b = jax.random.normal(ka2, (3, 100, feat), jnp.float32)
    out_b = jax.block_until_ready(
        attention_unit(vx_b, ax_b, w1, b1, w2, b2, max_block_m=128))
    ref_b = attention_unit_ref(vx_b, ax_b, w1, b1, w2, b2)
    assert out_b.shape == (3, 100, feat), out_b.shape
    err_b = float(jnp.max(jnp.abs(out_b - ref_b)))
    assert err_b < 5e-2, err_b

    print("KERNEL_OK")
</pallas_src>

<mosaic_0001>
module attributes {stable_mosaic.version = 11 : i64} {
  func.func @attention_unit_kernel(%arg0: i32, %arg1: memref<16x128xf32, #tpu.memory_space<vmem>>, %arg2: memref<16x128xf32, #tpu.memory_space<vmem>>, %arg3: memref<128x128xbf16, #tpu.memory_space<vmem>>, %arg4: memref<128x128xbf16, #tpu.memory_space<vmem>>, %arg5: memref<1x128xf32, #tpu.memory_space<vmem>>, %arg6: memref<128x128xbf16, #tpu.memory_space<vmem>>, %arg7: memref<1x128xf32, #tpu.memory_space<vmem>>, %arg8: memref<16x128xf32, #tpu.memory_space<vmem>>) attributes {dimension_semantics = [#tpu.dimension_semantics<parallel>], iteration_bounds = array<i64: 1>, scalar_prefetch = 0 : i64, scratch_operands = 0 : i64, tpu.core_type = #tpu.core_type<tc>, window_params = [{transform_indices = @transform_0, window_bounds = array<i64: 16, 128>}, {transform_indices = @transform_1, window_bounds = array<i64: 16, 128>}, {pipeline_mode = #tpu.pipeline_mode<synchronous>, transform_indices = @transform_2, window_bounds = array<i64: 128, 128>}, {pipeline_mode = #tpu.pipeline_mode<synchronous>, transform_indices = @transform_3, window_bounds = array<i64: 128, 128>}, {pipeline_mode = #tpu.pipeline_mode<synchronous>, transform_indices = @transform_4, window_bounds = array<i64: 1, 128>}, {pipeline_mode = #tpu.pipeline_mode<synchronous>, transform_indices = @transform_5, window_bounds = array<i64: 128, 128>}, {pipeline_mode = #tpu.pipeline_mode<synchronous>, transform_indices = @transform_6, window_bounds = array<i64: 1, 128>}, {transform_indices = @transform_7, window_bounds = array<i64: 16, 128>}]} {
    %c0 = arith.constant 0 : index
    %c0_0 = arith.constant 0 : index
    %0 = vector.load %arg1[%c0, %c0_0] : memref<16x128xf32, #tpu.memory_space<vmem>>, vector<16x128xf32>
    %1 = arith.truncf %0 : vector<16x128xf32> to vector<16x128xbf16>
    %c0_1 = arith.constant 0 : index
    %c0_2 = arith.constant 0 : index
    %2 = vector.load %arg2[%c0_1, %c0_2] : memref<16x128xf32, #tpu.memory_space<vmem>>, vector<16x128xf32>
    %3 = arith.truncf %2 : vector<16x128xf32> to vector<16x128xbf16>
    %c0_3 = arith.constant 0 : index
    %c0_4 = arith.constant 0 : index
    %4 = vector.load %arg3[%c0_3, %c0_4] : memref<128x128xbf16, #tpu.memory_space<vmem>>, vector<128x128xbf16>
    %cst = arith.constant dense<0.000000e+00> : vector<16x128xf32>
    %5 = tpu.matmul %1, %4, %cst {dimension_numbers = #tpu.dot_dimension_numbers<[1], [0], [0], [1], [0, 0, 1, 1], [], []>} : vector<16x128xbf16>, vector<128x128xbf16>, vector<16x128xf32> -> vector<16x128xf32>
    %c0_5 = arith.constant 0 : index
    %c0_6 = arith.constant 0 : index
    %6 = vector.load %arg4[%c0_5, %c0_6] : memref<128x128xbf16, #tpu.memory_space<vmem>>, vector<128x128xbf16>
    %cst_7 = arith.constant dense<0.000000e+00> : vector<16x128xf32>
    %7 = tpu.matmul %3, %6, %cst_7 {dimension_numbers = #tpu.dot_dimension_numbers<[1], [0], [0], [1], [0, 0, 1, 1], [], []>} : vector<16x128xbf16>, vector<128x128xbf16>, vector<16x128xf32> -> vector<16x128xf32>
    %8 = arith.addf %5, %7 : vector<16x128xf32>
    %c0_8 = arith.constant 0 : index
    %c0_9 = arith.constant 0 : index
    %9 = vector.load %arg5[%c0_8, %c0_9] : memref<1x128xf32, #tpu.memory_space<vmem>>, vector<1x128xf32>
    %10 = vector.broadcast %9 : vector<1x128xf32> to vector<16x128xf32>
    %11 = arith.addf %8, %10 : vector<16x128xf32>
    %cst_10 = arith.constant 0.000000e+00 : f32
    %12 = vector.broadcast %cst_10 : f32 to vector<16x128xf32>
    %13 = arith.maximumf %11, %12 : vector<16x128xf32>
    %14 = arith.truncf %13 : vector<16x128xf32> to vector<16x128xbf16>
    %c0_11 = arith.constant 0 : index
    %c0_12 = arith.constant 0 : index
    %15 = vector.load %arg6[%c0_11, %c0_12] : memref<128x128xbf16, #tpu.memory_space<vmem>>, vector<128x128xbf16>
    %cst_13 = arith.constant dense<0.000000e+00> : vector<16x128xf32>
    %16 = tpu.matmul %14, %15, %cst_13 {dimension_numbers = #tpu.dot_dimension_numbers<[1], [0], [0], [1], [0, 0, 1, 1], [], []>} : vector<16x128xbf16>, vector<128x128xbf16>, vector<16x128xf32> -> vector<16x128xf32>
    %c0_14 = arith.constant 0 : index
    %c0_15 = arith.constant 0 : index
    %17 = vector.load %arg7[%c0_14, %c0_15] : memref<1x128xf32, #tpu.memory_space<vmem>>, vector<1x128xf32>
    %18 = vector.broadcast %17 : vector<1x128xf32> to vector<16x128xf32>
    %19 = arith.addf %16, %18 : vector<16x128xf32>
    %cst_16 = arith.constant 0.000000e+00 : f32
    %20 = vector.broadcast %cst_16 : f32 to vector<16x128xf32>
    %21 = arith.maximumf %19, %20 : vector<16x128xf32>
    %c0_17 = arith.constant 0 : index
    %c0_18 = arith.constant 0 : index
    %22 = vector.load %arg8[%c0_17, %c0_18] : memref<16x128xf32, #tpu.memory_space<vmem>>, vector<16x128xf32>
    tpu.vector_store %arg8[%c0_17, %c0_18], %21 {strides = array<i32>} : memref<16x128xf32, #tpu.memory_space<vmem>>, vector<16x128xf32>,
    return
  }
  func.func @transform_0(%arg0: i32) -> (i32, i32) {
    %c0_i32 = arith.constant 0 : i32
    %c0_i32_0 = arith.constant 0 : i32
    return %arg0, %c0_i32 : i32, i32
  }
  func.func @transform_1(%arg0: i32) -> (i32, i32) {
    %c0_i32 = arith.constant 0 : i32
    %c0_i32_0 = arith.constant 0 : i32
    return %arg0, %c0_i32 : i32, i32
  }
  func.func @transform_2(%arg0: i32) -> (i32, i32) {
    %c0_i32 = arith.constant 0 : i32
    %c0_i32_0 = arith.constant 0 : i32
    %c0_i32_1 = arith.constant 0 : i32
    return %c0_i32, %c0_i32_0 : i32, i32
  }
  func.func @transform_3(%arg0: i32) -> (i32, i32) {
    %c0_i32 = arith.constant 0 : i32
    %c0_i32_0 = arith.constant 0 : i32
    %c0_i32_1 = arith.constant 0 : i32
    return %c0_i32, %c0_i32_0 : i32, i32
  }
  func.func @transform_4(%arg0: i32) -> (i32, i32) {
    %c0_i32 = arith.constant 0 : i32
    %c0_i32_0 = arith.constant 0 : i32
    %c0_i32_1 = arith.constant 0 : i32
    return %c0_i32, %c0_i32_0 : i32, i32
  }
  func.func @transform_5(%arg0: i32) -> (i32, i32) {
    %c0_i32 = arith.constant 0 : i32
    %c0_i32_0 = arith.constant 0 : i32
    %c0_i32_1 = arith.constant 0 : i32
    return %c0_i32, %c0_i32_0 : i32, i32
  }
  func.func @transform_6(%arg0: i32) -> (i32, i32) {
    %c0_i32 = arith.constant 0 : i32
    %c0_i32_0 = arith.constant 0 : i32
    %c0_i32_1 = arith.constant 0 : i32
    return %c0_i32, %c0_i32_0 : i32, i32
  }
  func.func @transform_7(%arg0: i32) -> (i32, i32) {
    %c0_i32 = arith.constant 0 : i32
    %c0_i32_0 = arith.constant 0 : i32
    return %arg0, %c0_i32 : i32, i32
  }
}

</mosaic_0001>

<llo_original>
// kernel: tpu_custom_call.1
$region0: #{tpu_custom_call.1}
  #allocation0 [shape = 'u32[]', space=smem, size = 0x4, offset = 0x4, fixed_abs, tag = 'smem constant byte address 0x4 - core index']
  #allocation1 [shape = 'u32[144,128]{1,0:T(1,128)}', space=vmem, size = 0x12000, scoped, tag = 'internal scratch']
  %s0 = inlined_call_operand.hbm [shape: f32[16,128], index: 0, kind: input, shape index: {}]
  %s1 = inlined_call_operand.hbm [shape: f32[16,128], index: 1, kind: input, shape index: {}]
  %s2 = inlined_call_operand.hbm [shape: bf16[128,128], index: 2, kind: input, shape index: {}]
  %s3 = inlined_call_operand.hbm [shape: bf16[128,128], index: 3, kind: input, shape index: {}]
  %s4 = inlined_call_operand.vmem [shape: f32[1,128], index: 4, kind: input, shape index: {}]
  %s5 = inlined_call_operand.hbm [shape: bf16[128,128], index: 5, kind: input, shape index: {}]
  %s6 = inlined_call_operand.vmem [shape: f32[1,128], index: 6, kind: input, shape index: {}]
  %s7 = inlined_call_operand.hbm [shape: f32[16,128], index: 7, kind: output, shape index: {}]
  %s8 = sld [smem:[#allocation0]]
  $region58: #{tpu_custom_call.1} parent=0
    _
  %s10 = ssub.s32 1, %s8
  %s11 = scalar_select 0, %s10, %s8
  $region1: #{tpu_custom_call.1} parent=0
    #allocation2 [shape = 'u8[8192]{0}', space=vmem, size = 0x2000, scoped, tag = 'input window, operand 0, single buffered']
    #allocation3 [shape = 's32[1]{0}', space=sflag, size = 0x4, scoped, tag = 'scoped memory for tpu_custom_call.1']
    #allocation4 [shape = 's32[1]{0}', space=sflag, size = 0x4, scoped, tag = 'scoped memory for tpu_custom_call.1']
    #allocation5 [shape = 'u8[8192]{0}', space=vmem, size = 0x2000, scoped, tag = 'input window, operand 1, single buffered']
    #allocation6 [shape = 's32[1]{0}', space=sflag, size = 0x4, scoped, tag = 'scoped memory for tpu_custom_call.1']
    #allocation7 [shape = 'u8[32768]{0}', space=vmem, size = 0x8000, scoped, tag = 'input window, operand 2, single buffered']
    #allocation8 [shape = 'u8[32768]{0}', space=vmem, size = 0x8000, scoped, tag = 'input window, operand 3, single buffered']
    #allocation9 [shape = 's32[1]{0}', space=sflag, size = 0x4, scoped, tag = 'scoped memory for tpu_custom_call.1']
    #allocation10 [shape = 'u8[32768]{0}', space=vmem, size = 0x8000, scoped, tag = 'input window, operand 5, single buffered']
    #allocation11 [shape = 'u8[8192]{0}', space=vmem, size = 0x2000, scoped, tag = 'output window, operand 0, single buffered']
    %12 = vsyncpa [#allocation3], 0
    %13 = vsyncpa [#allocation6], 0
    %14 = vsyncpa [#allocation9], 0
    %15 = vsyncpa [#allocation4], 0
    // Predicated region
    $region2: #{tpu_custom_call.1} parent=1 // pred_check
      _
    $region3: #{tpu_custom_call.1} parent=1 // pred_check_branch
      %17 = sbr.rel (0) target = $region5
    $region4: #{tpu_custom_call.1} parent=1 // pred_region
      %s19 = ssub.s32 256, 256
      %20 = vsyncadd [#allocation3], %s19
      %s21 = sshll.u32 [#allocation2], 4
      %s22 = int_to_ptr.vmem [resolvable:$true] %s21
      %27 = dma.hbm_to_vmem [thread:$0]  %s0, 256, %s22, [#allocation3], 128, 128, 8
    $region5: #{tpu_custom_call.1} parent=1 // pred_fallthru
      _
    // Predicated region
    $region6: #{tpu_custom_call.1} parent=1 // pred_check
      _
    $region7: #{tpu_custom_call.1} parent=1 // pred_check_branch
      %29 = sbr.rel (0) target = $region9
    $region8: #{tpu_custom_call.1} parent=1 // pred_region
      %s31 = ssub.s32 256, 256
      %32 = vsyncadd [#allocation6], %s31
      %s33 = sshll.u32 [#allocation5], 4
      %s34 = int_to_ptr.vmem [resolvable:$true] %s33
      %39 = dma.hbm_to_vmem [thread:$0]  %s1, 256, %s34, [#allocation6], 128, 128, 8
    $region9: #{tpu_custom_call.1} parent=1 // pred_fallthru
      _
    // Predicated region
    $region10: #{tpu_custom_call.1} parent=1 // pred_check
      _
    $region11: #{tpu_custom_call.1} parent=1 // pred_check_branch
      %41 = sbr.rel (0) target = $region13
    $region12: #{tpu_custom_call.1} parent=1 // pred_region
      %s43 = ssub.s32 1024, 1024
      %44 = vsyncadd [#allocation6], %s43
      %s45 = sshll.u32 [#allocation7], 4
      %s46 = int_to_ptr.vmem [resolvable:$true] %s45
      %51 = dma.hbm_to_vmem [thread:$0]  %s2, 1024, %s46, [#allocation6], 64, 64, 4
    $region13: #{tpu_custom_call.1} parent=1 // pred_fallthru
      _
    // Predicated region
    $region14: #{tpu_custom_call.1} parent=1 // pred_check
      _
    $region15: #{tpu_custom_call.1} parent=1 // pred_check_branch
      %53 = sbr.rel (0) target = $region17
    $region16: #{tpu_custom_call.1} parent=1 // pred_region
      %s55 = ssub.s32 1024, 1024
      %56 = vsyncadd [#allocation9], %s55
      %s57 = sshll.u32 [#allocation8], 4
      %s58 = int_to_ptr.vmem [resolvable:$true] %s57
      %63 = dma.hbm_to_vmem [thread:$0]  %s3, 1024, %s58, [#allocation9], 64, 64, 4
    $region17: #{tpu_custom_call.1} parent=1 // pred_fallthru
      _
    // Predicated region
    $region18: #{tpu_custom_call.1} parent=1 // pred_check
      _
    $region19: #{tpu_custom_call.1} parent=1 // pred_check_branch
      %65 = sbr.rel (0) target = $region21
    $region20: #{tpu_custom_call.1} parent=1 // pred_region
      _
    $region21: #{tpu_custom_call.1} parent=1 // pred_fallthru
      _
    // Predicated region
    $region22: #{tpu_custom_call.1} parent=1 // pred_check
      _
    $region23: #{tpu_custom_call.1} parent=1 // pred_check_branch
      %67 = sbr.rel (0) target = $region25
    $region24: #{tpu_custom_call.1} parent=1 // pred_region
      %s69 = ssub.s32 1024, 1024
      %70 = vsyncadd [#allocation9], %s69
      %s71 = sshll.u32 [#allocation10], 4
      %s72 = int_to_ptr.vmem [resolvable:$true] %s71
      %77 = dma.hbm_to_vmem [thread:$0]  %s5, 1024, %s72, [#allocation9], 64, 64, 4
    $region25: #{tpu_custom_call.1} parent=1 // pred_fallthru
      _
    // Predicated region
    $region26: #{tpu_custom_call.1} parent=1 // pred_check
      _
    $region27: #{tpu_custom_call.1} parent=1 // pred_check_branch
      %79 = sbr.rel (0) target = $region29
    $region28: #{tpu_custom_call.1} parent=1 // pred_region
      _
    $region29: #{tpu_custom_call.1} parent=1 // pred_fallthru
      _
    // Predicated region
    $region30: #{tpu_custom_call.1} parent=1 // pred_check
      _
    $region31: #{tpu_custom_call.1} parent=1 // pred_check_branch
      %81 = sbr.rel (0) target = $region33
    $region32: #{tpu_custom_call.1} parent=1 // pred_region
      %82 = dma.done [#allocation3], 256
    $region33: #{tpu_custom_call.1} parent=1 // pred_fallthru
      _
    // Predicated region
    $region34: #{tpu_custom_call.1} parent=1 // pred_check
      _
    $region35: #{tpu_custom_call.1} parent=1 // pred_check_branch
      %84 = sbr.rel (0) target = $region37
    $region36: #{tpu_custom_call.1} parent=1 // pred_region
      %85 = dma.done [#allocation6], 256
    $region37: #{tpu_custom_call.1} parent=1 // pred_fallthru
      _
    // Predicated region
    $region38: #{tpu_custom_call.1} parent=1 // pred_check
      _
    $region39: #{tpu_custom_call.1} parent=1 // pred_check_branch
      %87 = sbr.rel (0) target = $region41
    $region40: #{tpu_custom_call.1} parent=1 // pred_region
      %88 = dma.done [#allocation6], 1024
    $region41: #{tpu_custom_call.1} parent=1 // pred_fallthru
      _
    // Predicated region
    $region42: #{tpu_custom_call.1} parent=1 // pred_check
      _
    $region43: #{tpu_custom_call.1} parent=1 // pred_check_branch
      %90 = sbr.rel (0) target = $region45
    $region44: #{tpu_custom_call.1} parent=1 // pred_region
      %91 = dma.done [#allocation9], 1024
    $region45: #{tpu_custom_call.1} parent=1 // pred_fallthru
      _
    // Predicated region
    $region46: #{tpu_custom_call.1} parent=1 // pred_check
      _
    $region47: #{tpu_custom_call.1} parent=1 // pred_check_branch
      %93 = sbr.rel (0) target = $region49
    $region48: #{tpu_custom_call.1} parent=1 // pred_region
      %94 = dma.done [#allocation9], 1024
    $region49: #{tpu_custom_call.1} parent=1 // pred_fallthru
      _
    %v96 = vld [vmem:[#allocation2] sm:$0xff]
    %v97 = vld [vmem:[#allocation2 + $0x8] sm:$0xff]
    %v98 = vpack.c.bf16 %v97, %v96
    %v99 = vld [vmem:[#allocation5] sm:$0xff]
    %v100 = vld [vmem:[#allocation5 + $0x8] sm:$0xff]
    %v101 = vpack.c.bf16 %v100, %v99
    %v102 = vld [vmem:[#allocation7] sm:$0xf]
    %v103 = vld [vmem:[#allocation7 + $0x4] sm:$0xf]
    %v104 = vld [vmem:[#allocation7 + $0x8] sm:$0xf]
    %v105 = vld [vmem:[#allocation7 + $0xc] sm:$0xf]
    %v106 = vld [vmem:[#allocation7 + $0x10] sm:$0xf]
    %v107 = vld [vmem:[#allocation7 + $0x14] sm:$0xf]
    %v108 = vld [vmem:[#allocation7 + $0x18] sm:$0xf]
    %v109 = vld [vmem:[#allocation7 + $0x1c] sm:$0xf]
    %v110 = vld [vmem:[#allocation7 + $0x20] sm:$0xf]
    %v111 = vld [vmem:[#allocation7 + $0x24] sm:$0xf]
    %v112 = vld [vmem:[#allocation7 + $0x28] sm:$0xf]
    %v113 = vld [vmem:[#allocation7 + $0x2c] sm:$0xf]
    %v114 = vld [vmem:[#allocation7 + $0x30] sm:$0xf]
    %v115 = vld [vmem:[#allocation7 + $0x34] sm:$0xf]
    %v116 = vld [vmem:[#allocation7 + $0x38] sm:$0xf]
    %v117 = vld [vmem:[#allocation7 + $0x3c] sm:$0xf]
    %v118 = vld [vmem:[#allocation8] sm:$0xf]
    %v119 = vld [vmem:[#allocation8 + $0x4] sm:$0xf]
    %v120 = vld [vmem:[#allocation8 + $0x8] sm:$0xf]
    %v121 = vld [vmem:[#allocation8 + $0xc] sm:$0xf]
    %v122 = vld [vmem:[#allocation8 + $0x10] sm:$0xf]
    %v123 = vld [vmem:[#allocation8 + $0x14] sm:$0xf]
    %v124 = vld [vmem:[#allocation8 + $0x18] sm:$0xf]
    %v125 = vld [vmem:[#allocation8 + $0x1c] sm:$0xf]
    %v126 = vld [vmem:[#allocation8 + $0x20] sm:$0xf]
    %v127 = vld [vmem:[#allocation8 + $0x24] sm:$0xf]
    %v128 = vld [vmem:[#allocation8 + $0x28] sm:$0xf]
    %v129 = vld [vmem:[#allocation8 + $0x2c] sm:$0xf]
    %v130 = vld [vmem:[#allocation8 + $0x30] sm:$0xf]
    %v131 = vld [vmem:[#allocation8 + $0x34] sm:$0xf]
    %v132 = vld [vmem:[#allocation8 + $0x38] sm:$0xf]
    %v133 = vld [vmem:[#allocation8 + $0x3c] sm:$0xf]
    %v150 = vunpack.c.l.b16 %v118
    %v151 = vunpack.c.l.b16 %v119
    %v152 = vunpack.c.l.b16 %v120
    %v153 = vunpack.c.l.b16 %v121
    %v154 = vunpack.c.l.b16 %v122
    %v155 = vunpack.c.l.b16 %v123
    %v156 = vunpack.c.l.b16 %v124
    %v157 = vunpack.c.l.b16 %v125
    %v158 = vunpack.c.l.b16 %v126
    %v159 = vunpack.c.l.b16 %v127
    %v160 = vunpack.c.l.b16 %v128
    %v161 = vunpack.c.l.b16 %v129
    %v162 = vunpack.c.l.b16 %v130
    %v163 = vunpack.c.l.b16 %v131
    %v164 = vunpack.c.l.b16 %v132
    %v165 = vunpack.c.l.b16 %v133
    %v166 = vpack.c.b16 %v151, %v150
    %v167 = vpack.c.b16 %v153, %v152
    %v168 = vpack.c.b16 %v155, %v154
    %v169 = vpack.c.b16 %v157, %v156
    %v170 = vpack.c.b16 %v159, %v158
    %v171 = vpack.c.b16 %v161, %v160
    %v172 = vpack.c.b16 %v163, %v162
    %v173 = vpack.c.b16 %v165, %v164
    %182 = vmatprep.subr.bf16.mxu0 0
    %183 = vmatpush1.bf16.msra.mxu0 %v173
    %184 = vmatprep.subr.bf16.mxu0 0
    %185 = vmatpush1.bf16.msra.mxu0 %v172
    %186 = vmatprep.subr.bf16.mxu0 0
    %187 = vmatpush1.bf16.msra.mxu0 %v171
    %188 = vmatprep.subr.bf16.mxu0 0
    %189 = vmatpush1.bf16.msra.mxu0 %v170
    %190 = vmatprep.subr.bf16.mxu0 0
    %191 = vmatpush1.bf16.msra.mxu0 %v169
    %192 = vmatprep.subr.bf16.mxu0 0
    %193 = vmatpush1.bf16.msra.mxu0 %v168
    %194 = vmatprep.subr.bf16.mxu0 0
    %195 = vmatpush1.bf16.msra.mxu0 %v167
    %196 = vmatprep.subr.bf16.mxu0 0
    %197 = vmatpush1.bf16.msra.mxu0 %v166
    %198 = vmatprep.subr.bf16.mxu0 0
    %199 = vmatpush2.bf16.msra.mxu0 0
    %200 = vmatprep.subr.bf16.mxu0 0
    %201 = vmatpush2.bf16.msra.mxu0 0
    %202 = vmatprep.subr.bf16.mxu0 0
    %203 = vmatpush2.bf16.msra.mxu0 0
    %204 = vmatprep.subr.bf16.mxu0 0
    %205 = vmatpush2.bf16.msra.mxu0 0
    %206 = vmatprep.subr.bf16.mxu0 0
    %207 = vmatpush2.bf16.msra.mxu0 0
    %208 = vmatprep.subr.bf16.mxu0 0
    %209 = vmatpush2.bf16.msra.mxu0 0
    %210 = vmatprep.subr.bf16.mxu0 0
    %211 = vmatpush2.bf16.msra.mxu0 0
    %212 = vmatprep.subr.bf16.mxu0 0
    %213 = vmatpush2.bf16.msra.mxu0 0
    %214 = vmatprep.mubr.bf16.mxu0 0
    %215 = vmatmul.mubr.bf16.gmra.mxu0 %v101
    %v216 = vpop.f32.mrf.mxu0
    %v217 = vadd.f32 0.0, %v216
    %v218 = vpop.f32.mrf.mxu0
    %v219 = vpop.f32.mrf.mxu0
    %v220 = vadd.f32 0.0, %v219
    %v221 = vpop.f32.mrf.mxu0
    %222 = vdwg.mxu0
    %v239 = vunpack.c.l.b16 %v102
    %v240 = vunpack.c.l.b16 %v103
    %v241 = vunpack.c.l.b16 %v104
    %v242 = vunpack.c.l.b16 %v105
    %v243 = vunpack.c.l.b16 %v106
    %v244 = vunpack.c.l.b16 %v107
    %v245 = vunpack.c.l.b16 %v108
    %v246 = vunpack.c.l.b16 %v109
    %v247 = vunpack.c.l.b16 %v110
    %v248 = vunpack.c.l.b16 %v111
    %v249 = vunpack.c.l.b16 %v112
    %v250 = vunpack.c.l.b16 %v113
    %v251 = vunpack.c.l.b16 %v114
    %v252 = vunpack.c.l.b16 %v115
    %v253 = vunpack.c.l.b16 %v116
    %v254 = vunpack.c.l.b16 %v117
    %v255 = vpack.c.b16 %v240, %v239
    %v256 = vpack.c.b16 %v242, %v241
    %v257 = vpack.c.b16 %v244, %v243
    %v258 = vpack.c.b16 %v246, %v245
    %v259 = vpack.c.b16 %v248, %v247
    %v260 = vpack.c.b16 %v250, %v249
    %v261 = vpack.c.b16 %v252, %v251
    %v262 = vpack.c.b16 %v254, %v253
    %271 = vmatprep.subr.bf16.mxu0 0
    %272 = vmatpush1.bf16.msra.mxu0 %v262
    %273 = vmatprep.subr.bf16.mxu0 0
    %274 = vmatpush1.bf16.msra.mxu0 %v261
    %275 = vmatprep.subr.bf16.mxu0 0
    %276 = vmatpush1.bf16.msra.mxu0 %v260
    %277 = vmatprep.subr.bf16.mxu0 0
    %278 = vmatpush1.bf16.msra.mxu0 %v259
    %279 = vmatprep.subr.bf16.mxu0 0
    %280 = vmatpush1.bf16.msra.mxu0 %v258
    %281 = vmatprep.subr.bf16.mxu0 0
    %282 = vmatpush1.bf16.msra.mxu0 %v257
    %283 = vmatprep.subr.bf16.mxu0 0
    %284 = vmatpush1.bf16.msra.mxu0 %v256
    %285 = vmatprep.subr.bf16.mxu0 0
    %286 = vmatpush1.bf16.msra.mxu0 %v255
    %287 = vmatprep.subr.bf16.mxu0 0
    %288 = vmatpush2.bf16.msra.mxu0 0
    %289 = vmatprep.subr.bf16.mxu0 0
    %290 = vmatpush2.bf16.msra.mxu0 0
    %291 = vmatprep.subr.bf16.mxu0 0
    %292 = vmatpush2.bf16.msra.mxu0 0
    %293 = vmatprep.subr.bf16.mxu0 0
    %294 = vmatpush2.bf16.msra.mxu0 0
    %295 = vmatprep.subr.bf16.mxu0 0
    %296 = vmatpush2.bf16.msra.mxu0 0
    %297 = vmatprep.subr.bf16.mxu0 0
    %298 = vmatpush2.bf16.msra.mxu0 0
    %299 = vmatprep.subr.bf16.mxu0 0
    %300 = vmatpush2.bf16.msra.mxu0 0
    %301 = vmatprep.subr.bf16.mxu0 0
    %302 = vmatpush2.bf16.msra.mxu0 0
    %303 = vmatprep.mubr.bf16.mxu0 0
    %304 = vmatmul.mubr.bf16.gmra.mxu0 %v98
    %v305 = vpop.f32.mrf.mxu0
    %v306 = vadd.f32 %v217, %v305
    %v307 = vpop.f32.mrf.mxu0
    %v308 = vpop.f32.mrf.mxu0
    %v309 = vadd.f32 %v220, %v308
    %v310 = vpop.f32.mrf.mxu0
    %311 = vdwg.mxu0
    %v312 = vld [vmem:[%s4] sm:$0x1]
    %v314 = vlaneseq
    %v315 = vshrl.u32 %v314, 7
    %v316 = vsub.s32 0, %v315
    %v317 = vrot.slane %v312, %v316
    %v319 = vadd.f32 %v306, %v317
    %v320 = vadd.f32 %v309, %v317
    %v321 = vmax.f32 %v319, 0.0
    %v322 = vmax.f32 %v320, 0.0
    %v323 = vpack.c.bf16 %v322, %v321
    %v324 = vld [vmem:[#allocation10] sm:$0xf]
    %v325 = vld [vmem:[#allocation10 + $0x4] sm:$0xf]
    %v326 = vld [vmem:[#allocation10 + $0x8] sm:$0xf]
    %v327 = vld [vmem:[#allocation10 + $0xc] sm:$0xf]
    %v328 = vld [vmem:[#allocation10 + $0x10] sm:$0xf]
    %v329 = vld [vmem:[#allocation10 + $0x14] sm:$0xf]
    %v330 = vld [vmem:[#allocation10 + $0x18] sm:$0xf]
    %v331 = vld [vmem:[#allocation10 + $0x1c] sm:$0xf]
    %v332 = vld [vmem:[#allocation10 + $0x20] sm:$0xf]
    %v333 = vld [vmem:[#allocation10 + $0x24] sm:$0xf]
    %v334 = vld [vmem:[#allocation10 + $0x28] sm:$0xf]
    %v335 = vld [vmem:[#allocation10 + $0x2c] sm:$0xf]
    %v336 = vld [vmem:[#allocation10 + $0x30] sm:$0xf]
    %v337 = vld [vmem:[#allocation10 + $0x34] sm:$0xf]
    %v338 = vld [vmem:[#allocation10 + $0x38] sm:$0xf]
    %v339 = vld [vmem:[#allocation10 + $0x3c] sm:$0xf]
    %v340 = vld [vmem:[%s6] sm:$0x1]
    %v342 = vlaneseq
    %v343 = vshrl.u32 %v342, 7
    %v344 = vsub.s32 0, %v343
    %v345 = vrot.slane %v340, %v344
    %v363 = vunpack.c.l.b16 %v324
    %v364 = vunpack.c.l.b16 %v325
    %v365 = vunpack.c.l.b16 %v326
    %v366 = vunpack.c.l.b16 %v327
    %v367 = vunpack.c.l.b16 %v328
    %v368 = vunpack.c.l.b16 %v329
    %v369 = vunpack.c.l.b16 %v330
    %v370 = vunpack.c.l.b16 %v331
    %v371 = vunpack.c.l.b16 %v332
    %v372 = vunpack.c.l.b16 %v333
    %v373 = vunpack.c.l.b16 %v334
    %v374 = vunpack.c.l.b16 %v335
    %v375 = vunpack.c.l.b16 %v336
    %v376 = vunpack.c.l.b16 %v337
    %v377 = vunpack.c.l.b16 %v338
    %v378 = vunpack.c.l.b16 %v339
    %v379 = vpack.c.b16 %v364, %v363
    %v380 = vpack.c.b16 %v366, %v365
    %v381 = vpack.c.b16 %v368, %v367
    %v382 = vpack.c.b16 %v370, %v369
    %v383 = vpack.c.b16 %v372, %v371
    %v384 = vpack.c.b16 %v374, %v373
    %v385 = vpack.c.b16 %v376, %v375
    %v386 = vpack.c.b16 %v378, %v377
    %395 = vmatprep.subr.bf16.mxu0 0
    %396 = vmatpush1.bf16.msra.mxu0 %v386
    %397 = vmatprep.subr.bf16.mxu0 0
    %398 = vmatpush1.bf16.msra.mxu0 %v385
    %399 = vmatprep.subr.bf16.mxu0 0
    %400 = vmatpush1.bf16.msra.mxu0 %v384
    %401 = vmatprep.subr.bf16.mxu0 0
    %402 = vmatpush1.bf16.msra.mxu0 %v383
    %403 = vmatprep.subr.bf16.mxu0 0
    %404 = vmatpush1.bf16.msra.mxu0 %v382
    %405 = vmatprep.subr.bf16.mxu0 0
    %406 = vmatpush1.bf16.msra.mxu0 %v381
    %407 = vmatprep.subr.bf16.mxu0 0
    %408 = vmatpush1.bf16.msra.mxu0 %v380
    %409 = vmatprep.subr.bf16.mxu0 0
    %410 = vmatpush1.bf16.msra.mxu0 %v379
    %411 = vmatprep.subr.bf16.mxu0 0
    %412 = vmatpush2.bf16.msra.mxu0 0
    %413 = vmatprep.subr.bf16.mxu0 0
    %414 = vmatpush2.bf16.msra.mxu0 0
    %415 = vmatprep.subr.bf16.mxu0 0
    %416 = vmatpush2.bf16.msra.mxu0 0
    %417 = vmatprep.subr.bf16.mxu0 0
    %418 = vmatpush2.bf16.msra.mxu0 0
    %419 = vmatprep.subr.bf16.mxu0 0
    %420 = vmatpush2.bf16.msra.mxu0 0
    %421 = vmatprep.subr.bf16.mxu0 0
    %422 = vmatpush2.bf16.msra.mxu0 0
    %423 = vmatprep.subr.bf16.mxu0 0
    %424 = vmatpush2.bf16.msra.mxu0 0
    %425 = vmatprep.subr.bf16.mxu0 0
    %426 = vmatpush2.bf16.msra.mxu0 0
    %427 = vmatprep.mubr.bf16.mxu0 0
    %428 = vmatmul.mubr.bf16.gmra.mxu0 %v323
    %v429 = vpop.f32.mrf.mxu0
    %v430 = vadd.f32 %v345, %v429
    %v431 = vpop.f32.mrf.mxu0
    %v432 = vpop.f32.mrf.mxu0
    %v433 = vadd.f32 %v345, %v432
    %v434 = vpop.f32.mrf.mxu0
    %435 = vdwg.mxu0
    %v436 = vmax.f32 %v430, 0.0
    %v437 = vmax.f32 %v433, 0.0
    %438 = vst [vmem:[#allocation11] sm:$0xff] %v436
    %439 = vst [vmem:[#allocation11 + $0x8] sm:$0xff] %v437
    // Predicated region
    $region50: #{tpu_custom_call.1} parent=1 // pred_check
      _
    $region51: #{tpu_custom_call.1} parent=1 // pred_check_branch
      %441 = sbr.rel (0) target = $region53
    $region52: #{tpu_custom_call.1} parent=1 // pred_region
      %s443 = ssub.s32 256, 256
      %444 = vsyncadd [#allocation4], %s443
      %s445 = sshll.u32 [#allocation11], 4
      %s446 = int_to_ptr.vmem [resolvable:$true] %s445
      %451 = dma.vmem_to_hbm [thread:$0]  %s446, 256, %s7, [#allocation4], 128, 128, 8
    $region53: #{tpu_custom_call.1} parent=1 // pred_fallthru
      _
    // Predicated region
    $region54: #{tpu_custom_call.1} parent=1 // pred_check
      _
    $region55: #{tpu_custom_call.1} parent=1 // pred_check_branch
      %453 = sbr.rel (0) target = $region57
    $region56: #{tpu_custom_call.1} parent=1 // pred_region
      %454 = dma.done [#allocation4], 256
    $region57: #{tpu_custom_call.1} parent=1 // pred_fallthru
      _
    %455 = vsyncpa [#allocation3], 1
    %456 = vsyncpa [#allocation6], 1
    %457 = vsyncpa [#allocation9], 1
    %458 = vsyncpa [#allocation4], 1

</llo_original>
